<compile_context>
chip_gen: v6e
topology: v6e:2x2x1
jax: 0.10.0
libtpu: 0.0.40
codegen_flags: <defaults>
</compile_context>

<pallas_src>
import math

import jax
import jax.numpy as jnp
from jax.experimental import pallas as pl
from jax.experimental.pallas import tpu as pltpu


def _lstm_cell_kernel(xh_ref, c_ref, w_ref, b_ref, c_out_ref, h_out_ref):
    # One fused MXU matmul: (bm, I+H) @ (I+H, 4H), f32 accumulation.
    xh = xh_ref[...].astype(w_ref.dtype)
    gates = (
        jnp.dot(xh, w_ref[...], preferred_element_type=jnp.float32)
        + b_ref[...].astype(jnp.float32)
    )
    H = c_ref.shape[-1]
    # NOTE: with H < 128 these gate slices are sub-lane cuts of one vreg and
    # the (bm, H) output stores are masked; they become lane-dense (unmasked
    # vst) automatically once H is a multiple of 128.
    forget_gate = jax.nn.sigmoid(gates[:, 0 * H:1 * H])
    input_gate = jax.nn.sigmoid(gates[:, 1 * H:2 * H])
    cell_gate = jnp.tanh(gates[:, 2 * H:3 * H])
    output_gate = jax.nn.sigmoid(gates[:, 3 * H:4 * H])

    c_prev = c_ref[...].astype(jnp.float32)          # cell-state math in f32
    c_next = forget_gate * c_prev + input_gate * cell_gate
    h_next = output_gate * jnp.tanh(c_next)

    c_out_ref[...] = c_next.astype(c_out_ref.dtype)
    h_out_ref[...] = h_next.astype(h_out_ref.dtype)


def prepare_lstm_params(wx, bx, wh, bh, compute_dtype=jnp.float32):
    """Once-per-model weight prep (hoisted out of the per-step path).

    wx: (4H, I), wh: (4H, H), bx/bh: (4H,)
    returns w_fused: (I+H, 4H) in compute_dtype, bias: (1, 4H) in f32.
    """
    w_fused = jnp.concatenate([wx.T, wh.T], axis=0).astype(compute_dtype)
    bias = (bx + bh).reshape(1, -1).astype(jnp.float32)
    return w_fused, bias


def _pick_block_b(B):
    for bm in (512, 256, 128, 64, 32, 16, 8):
        if B % bm == 0:
            return bm
    return B  # tiny batch: single full-extent block


@jax.jit
def lstm_cell(x, c_prev, h_prev, w_fused, bias):
    """x: (B, I); c_prev/h_prev: (B, H); w_fused: (I+H, 4H); bias: (1, 4H)."""
    B, I = x.shape
    H = h_prev.shape[-1]
    K = I + H
    bm = _pick_block_b(B)

    # Per-call activation concat (tiny); weight prep is already hoisted.
    xh = jnp.concatenate([x, h_prev], axis=-1)       # (B, I+H)

    out_shape = (
        jax.ShapeDtypeStruct((B, H), c_prev.dtype),  # c_next
        jax.ShapeDtypeStruct((B, H), h_prev.dtype),  # h_next
    )
    c_next, h_next = pl.pallas_call(
        _lstm_cell_kernel,
        out_shape=out_shape,
        grid=(B // bm,),
        in_specs=[
            pl.BlockSpec((bm, K), lambda b: (b, 0)),        # [x, h]
            pl.BlockSpec((bm, H), lambda b: (b, 0)),        # c_prev
            pl.BlockSpec((K, 4 * H), lambda b: (0, 0)),     # fused weights (VMEM-resident)
            pl.BlockSpec((1, 4 * H), lambda b: (0, 0)),     # fused bias
        ],
        out_specs=(
            pl.BlockSpec((bm, H), lambda b: (b, 0)),
            pl.BlockSpec((bm, H), lambda b: (b, 0)),
        ),
        compiler_params=pltpu.CompilerParams(
            dimension_semantics=("parallel",),  # shards batch tiles across v7x's 2 TCs
        ),
    )(xh, c_prev, w_fused, bias)
    return c_next, h_next


def lstm_cell_ref(x, c_prev, h_prev, wx, bx, wh, bh):
    """Pure-JAX reference mirroring the PyTorch module."""
    gates = x @ wx.T + bx + h_prev @ wh.T + bh
    H = h_prev.shape[-1]
    f, i, g, o = (gates[:, k * H:(k + 1) * H] for k in range(4))
    f = jax.nn.sigmoid(f)
    i = jax.nn.sigmoid(i)
    g = jnp.tanh(g)
    o = jax.nn.sigmoid(o)
    c_next = f * c_prev + i * g
    h_next = o * jnp.tanh(c_next)
    return c_next, h_next


if __name__ == "__main__":
    B, I, H = 8, 16, 32
    key = jax.random.PRNGKey(0)
    k_x, k_c, k_h, k_wx, k_bx, k_wh, k_bh = jax.random.split(key, 7)

    # Deterministic init matching _init_weights: U(-std, std), std = 1/sqrt(H).
    std = 1.0 / math.sqrt(H)
    wx = jax.random.uniform(k_wx, (4 * H, I), jnp.float32, -std, std)
    bx = jax.random.uniform(k_bx, (4 * H,), jnp.float32, -std, std)
    wh = jax.random.uniform(k_wh, (4 * H, H), jnp.float32, -std, std)
    bh = jax.random.uniform(k_bh, (4 * H,), jnp.float32, -std, std)

    x = jax.random.normal(k_x, (B, I), jnp.float32)
    c_prev = jax.random.normal(k_c, (B, H), jnp.float32)
    h_prev = jax.random.normal(k_h, (B, H), jnp.float32)

    c_ref_out, h_ref_out = lstm_cell_ref(x, c_prev, h_prev, wx, bx, wh, bh)

    # --- f32 path (exactness check) ---
    w_fused, bias = prepare_lstm_params(wx, bx, wh, bh)  # done ONCE, not per step
    c_next, h_next = lstm_cell(x, c_prev, h_prev, w_fused, bias)
    jax.block_until_ready((c_next, h_next))
    assert jnp.allclose(c_next, c_ref_out, atol=1e-5, rtol=1e-5)
    assert jnp.allclose(h_next, h_ref_out, atol=1e-5, rtol=1e-5)

    # --- bf16 compute path (native MXU dtype; f32 accumulation) ---
    w_bf16, bias_bf16 = prepare_lstm_params(wx, bx, wh, bh, compute_dtype=jnp.bfloat16)
    c_bf, h_bf = lstm_cell(
        x.astype(jnp.bfloat16),
        c_prev.astype(jnp.bfloat16),
        h_prev.astype(jnp.bfloat16),
        w_bf16,
        bias_bf16,
    )
    jax.block_until_ready((c_bf, h_bf))
    assert jnp.allclose(c_bf.astype(jnp.float32), c_ref_out, atol=1e-1)
    assert jnp.allclose(h_bf.astype(jnp.float32), h_ref_out, atol=1e-1)

    print("KERNEL_OK")
</pallas_src>

<mosaic_0001>
module attributes {stable_mosaic.version = 11 : i64} {
  func.func @_lstm_cell_kernel(%arg0: i32, %arg1: memref<8x48xf32, #tpu.memory_space<vmem>>, %arg2: memref<8x32xf32, #tpu.memory_space<vmem>>, %arg3: memref<48x128xf32, #tpu.memory_space<vmem>>, %arg4: memref<1x128xf32, #tpu.memory_space<vmem>>, %arg5: memref<8x32xf32, #tpu.memory_space<vmem>>, %arg6: memref<8x32xf32, #tpu.memory_space<vmem>>) attributes {dimension_semantics = [#tpu.dimension_semantics<parallel>], iteration_bounds = array<i64: 1>, scalar_prefetch = 0 : i64, scratch_operands = 0 : i64, tpu.core_type = #tpu.core_type<tc>, window_params = [{transform_indices = @transform_0, window_bounds = array<i64: 8, 48>}, {transform_indices = @transform_1, window_bounds = array<i64: 8, 32>}, {pipeline_mode = #tpu.pipeline_mode<synchronous>, transform_indices = @transform_2, window_bounds = array<i64: 48, 128>}, {pipeline_mode = #tpu.pipeline_mode<synchronous>, transform_indices = @transform_3, window_bounds = array<i64: 1, 128>}, {transform_indices = @transform_4, window_bounds = array<i64: 8, 32>}, {transform_indices = @transform_5, window_bounds = array<i64: 8, 32>}]} {
    %c0 = arith.constant 0 : index
    %c0_0 = arith.constant 0 : index
    %0 = vector.load %arg1[%c0, %c0_0] : memref<8x48xf32, #tpu.memory_space<vmem>>, vector<8x48xf32>
    %c0_1 = arith.constant 0 : index
    %c0_2 = arith.constant 0 : index
    %1 = vector.load %arg3[%c0_1, %c0_2] : memref<48x128xf32, #tpu.memory_space<vmem>>, vector<48x128xf32>
    %cst = arith.constant dense<0.000000e+00> : vector<8x128xf32>
    %2 = tpu.matmul %0, %1, %cst {dimension_numbers = #tpu.dot_dimension_numbers<[1], [0], [0], [1], [0, 0, 1, 1], [], []>} : vector<8x48xf32>, vector<48x128xf32>, vector<8x128xf32> -> vector<8x128xf32>
    %c0_3 = arith.constant 0 : index
    %c0_4 = arith.constant 0 : index
    %3 = vector.load %arg4[%c0_3, %c0_4] : memref<1x128xf32, #tpu.memory_space<vmem>>, vector<1x128xf32>
    %4 = vector.broadcast %3 : vector<1x128xf32> to vector<8x128xf32>
    %5 = arith.addf %2, %4 : vector<8x128xf32>
    %6 = vector.extract_strided_slice %5 {offsets = [0, 0], sizes = [8, 32], strides = [1, 1]} : vector<8x128xf32> to vector<8x32xf32>
    %7 = arith.negf %6 : vector<8x32xf32>
    %8 = math.exp %7 : vector<8x32xf32>
    %cst_5 = arith.constant 1.000000e+00 : f32
    %9 = vector.broadcast %cst_5 : f32 to vector<8x32xf32>
    %10 = arith.addf %9, %8 : vector<8x32xf32>
    %11 = arith.divf %9, %10 : vector<8x32xf32>
    %12 = vector.extract_strided_slice %5 {offsets = [0, 32], sizes = [8, 32], strides = [1, 1]} : vector<8x128xf32> to vector<8x32xf32>
    %13 = arith.negf %12 : vector<8x32xf32>
    %14 = math.exp %13 : vector<8x32xf32>
    %cst_6 = arith.constant 1.000000e+00 : f32
    %15 = vector.broadcast %cst_6 : f32 to vector<8x32xf32>
    %16 = arith.addf %15, %14 : vector<8x32xf32>
    %17 = arith.divf %15, %16 : vector<8x32xf32>
    %18 = vector.extract_strided_slice %5 {offsets = [0, 64], sizes = [8, 32], strides = [1, 1]} : vector<8x128xf32> to vector<8x32xf32>
    %19 = math.tanh %18 : vector<8x32xf32>
    %20 = vector.extract_strided_slice %5 {offsets = [0, 96], sizes = [8, 32], strides = [1, 1]} : vector<8x128xf32> to vector<8x32xf32>
    %21 = arith.negf %20 : vector<8x32xf32>
    %22 = math.exp %21 : vector<8x32xf32>
    %cst_7 = arith.constant 1.000000e+00 : f32
    %23 = vector.broadcast %cst_7 : f32 to vector<8x32xf32>
    %24 = arith.addf %23, %22 : vector<8x32xf32>
    %25 = arith.divf %23, %24 : vector<8x32xf32>
    %c0_8 = arith.constant 0 : index
    %c0_9 = arith.constant 0 : index
    %26 = vector.load %arg2[%c0_8, %c0_9] : memref<8x32xf32, #tpu.memory_space<vmem>>, vector<8x32xf32>
    %27 = arith.mulf %11, %26 : vector<8x32xf32>
    %28 = arith.mulf %17, %19 : vector<8x32xf32>
    %29 = arith.addf %27, %28 : vector<8x32xf32>
    %30 = math.tanh %29 : vector<8x32xf32>
    %31 = arith.mulf %25, %30 : vector<8x32xf32>
    %c0_10 = arith.constant 0 : index
    %c0_11 = arith.constant 0 : index
    %32 = vector.load %arg5[%c0_10, %c0_11] : memref<8x32xf32, #tpu.memory_space<vmem>>, vector<8x32xf32>
    tpu.vector_store %arg5[%c0_10, %c0_11], %29 {strides = array<i32>} : memref<8x32xf32, #tpu.memory_space<vmem>>, vector<8x32xf32>,
    %c0_12 = arith.constant 0 : index
    %c0_13 = arith.constant 0 : index
    %33 = vector.load %arg6[%c0_12, %c0_13] : memref<8x32xf32, #tpu.memory_space<vmem>>, vector<8x32xf32>
    tpu.vector_store %arg6[%c0_12, %c0_13], %31 {strides = array<i32>} : memref<8x32xf32, #tpu.memory_space<vmem>>, vector<8x32xf32>,
    return
  }
  func.func @transform_0(%arg0: i32) -> (i32, i32) {
    %c0_i32 = arith.constant 0 : i32
    %c0_i32_0 = arith.constant 0 : i32
    return %arg0, %c0_i32 : i32, i32
  }
  func.func @transform_1(%arg0: i32) -> (i32, i32) {
    %c0_i32 = arith.constant 0 : i32
    %c0_i32_0 = arith.constant 0 : i32
    return %arg0, %c0_i32 : i32, i32
  }
  func.func @transform_2(%arg0: i32) -> (i32, i32) {
    %c0_i32 = arith.constant 0 : i32
    %c0_i32_0 = arith.constant 0 : i32
    %c0_i32_1 = arith.constant 0 : i32
    return %c0_i32, %c0_i32_0 : i32, i32
  }
  func.func @transform_3(%arg0: i32) -> (i32, i32) {
    %c0_i32 = arith.constant 0 : i32
    %c0_i32_0 = arith.constant 0 : i32
    %c0_i32_1 = arith.constant 0 : i32
    return %c0_i32, %c0_i32_0 : i32, i32
  }
  func.func @transform_4(%arg0: i32) -> (i32, i32) {
    %c0_i32 = arith.constant 0 : i32
    %c0_i32_0 = arith.constant 0 : i32
    return %arg0, %c0_i32 : i32, i32
  }
  func.func @transform_5(%arg0: i32) -> (i32, i32) {
    %c0_i32 = arith.constant 0 : i32
    %c0_i32_0 = arith.constant 0 : i32
    return %arg0, %c0_i32 : i32, i32
  }
}

</mosaic_0001>

<llo_original>
// kernel: lstm_cell.1
$region0: #{lstm_cell.1}
  #allocation0 [shape = 'u32[]', space=smem, size = 0x4, offset = 0x4, fixed_abs, tag = 'smem constant byte address 0x4 - core index']
  #allocation1 [shape = 'u32[144,128]{1,0:T(1,128)}', space=vmem, size = 0x12000, scoped, tag = 'internal scratch']
  %s0 = inlined_call_operand.vmem [shape: f32[8,48], index: 0, kind: input, shape index: {}]
  %s1 = inlined_call_operand.vmem [shape: f32[8,32], index: 1, kind: input, shape index: {}]
  %s2 = inlined_call_operand.hbm [shape: f32[48,128], index: 2, kind: input, shape index: {}]
  %s3 = inlined_call_operand.vmem [shape: f32[1,128], index: 3, kind: input, shape index: {}]
  %s4 = inlined_call_operand.hbm [shape: f32[8,32], index: 4, kind: output, shape index: {0}]
  %s5 = inlined_call_operand.hbm [shape: f32[8,32], index: 5, kind: output, shape index: {1}]
  %6 = xla_tuple %s4, %s5
  %s7 = sld [smem:[#allocation0]]
  $region38: #{lstm_cell.1} parent=0
    _
  %s9 = ssub.s32 1, %s7
  %s10 = scalar_select 0, %s9, %s7
  $region1: #{lstm_cell.1} parent=0
    #allocation2 [shape = 'u8[24576]{0}', space=vmem, size = 0x6000, scoped, tag = 'input window, operand 2, single buffered']
    #allocation3 [shape = 's32[1]{0}', space=sflag, size = 0x4, scoped, tag = 'scoped memory for lstm_cell.1']
    #allocation4 [shape = 's32[1]{0}', space=sflag, size = 0x4, scoped, tag = 'scoped memory for lstm_cell.1']
    #allocation5 [shape = 'u8[4096]{0}', space=vmem, size = 0x1000, scoped, tag = 'output window, operand 0, single buffered']
    #allocation6 [shape = 'u8[4096]{0}', space=vmem, size = 0x1000, scoped, tag = 'output window, operand 1, single buffered']
    #allocation7 [shape = 's32[1]{0}', space=sflag, size = 0x4, scoped, tag = 'scoped memory for lstm_cell.1']
    %11 = vsyncpa [#allocation3], 0
    %12 = vsyncpa [#allocation4], 0
    %13 = vsyncpa [#allocation7], 0
    // Predicated region
    $region2: #{lstm_cell.1} parent=1 // pred_check
      _
    $region3: #{lstm_cell.1} parent=1 // pred_check_branch
      %15 = sbr.rel (0) target = $region5
    $region4: #{lstm_cell.1} parent=1 // pred_region
      _
    $region5: #{lstm_cell.1} parent=1 // pred_fallthru
      _
    // Predicated region
    $region6: #{lstm_cell.1} parent=1 // pred_check
      _
    $region7: #{lstm_cell.1} parent=1 // pred_check_branch
      %17 = sbr.rel (0) target = $region9
    $region8: #{lstm_cell.1} parent=1 // pred_region
      _
    $region9: #{lstm_cell.1} parent=1 // pred_fallthru
      _
    // Predicated region
    $region10: #{lstm_cell.1} parent=1 // pred_check
      _
    $region11: #{lstm_cell.1} parent=1 // pred_check_branch
      %19 = sbr.rel (0) target = $region13
    $region12: #{lstm_cell.1} parent=1 // pred_region
      %s21 = ssub.s32 768, 768
      %22 = vsyncadd [#allocation3], %s21
      %s23 = sshll.u32 [#allocation2], 4
      %s24 = int_to_ptr.vmem [resolvable:$true] %s23
      %29 = dma.hbm_to_vmem [thread:$0]  %s2, 768, %s24, [#allocation3], 128, 128, 8
    $region13: #{lstm_cell.1} parent=1 // pred_fallthru
      _
    // Predicated region
    $region14: #{lstm_cell.1} parent=1 // pred_check
      _
    $region15: #{lstm_cell.1} parent=1 // pred_check_branch
      %31 = sbr.rel (0) target = $region17
    $region16: #{lstm_cell.1} parent=1 // pred_region
      _
    $region17: #{lstm_cell.1} parent=1 // pred_fallthru
      _
    // Predicated region
    $region18: #{lstm_cell.1} parent=1 // pred_check
      _
    $region19: #{lstm_cell.1} parent=1 // pred_check_branch
      %33 = sbr.rel (0) target = $region21
    $region20: #{lstm_cell.1} parent=1 // pred_region
      %34 = dma.done [#allocation3], 768
    $region21: #{lstm_cell.1} parent=1 // pred_fallthru
      _
    %v35 = vld [vmem:[%s0] sm:$0xff]
    %v36 = vld [vmem:[#allocation2] sm:$0xff]
    %v37 = vld [vmem:[#allocation2 + $0x8] sm:$0xff]
    %v38 = vld [vmem:[#allocation2 + $0x10] sm:$0xff]
    %v39 = vld [vmem:[#allocation2 + $0x18] sm:$0xff]
    %v40 = vld [vmem:[#allocation2 + $0x20] sm:$0xff]
    %v41 = vld [vmem:[#allocation2 + $0x28] sm:$0xff]
    %v42 = vld [vmem:[%s3] sm:$0x1]
    %v44 = vlaneseq
    %v45 = vshrl.u32 %v44, 7
    %v46 = vsub.s32 0, %v45
    %v47 = vrot.slane %v42, %v46
    %vm49 = vcmask 392192
    %v51 = vsel %vm49, %v35, 0
    %53 = vmatprep.subr.mxu0 0.0
    %54 = vmatpush1.msra.mxu0 0.0
    %55 = vmatprep.subr.mxu0 0.0
    %56 = vmatpush1.msra.mxu0 0.0
    %57 = vmatprep.subr.mxu0 0.0
    %58 = vmatpush1.msra.mxu0 0.0
    %59 = vmatprep.subr.mxu0 0.0
    %60 = vmatpush1.msra.mxu0 0.0
    %61 = vmatprep.subr.mxu0 0.0
    %62 = vmatpush1.msra.mxu0 0.0
    %63 = vmatprep.subr.mxu0 0.0
    %64 = vmatpush1.msra.mxu0 0.0
    %65 = vmatprep.subr.mxu0 0.0
    %66 = vmatpush1.msra.mxu0 0.0
    %67 = vmatprep.subr.mxu0 0.0
    %68 = vmatpush1.msra.mxu0 0.0
    %69 = vmatprep.subr.mxu0 0.0
    %70 = vmatpush1.msra.mxu0 0.0
    %71 = vmatprep.subr.mxu0 0.0
    %72 = vmatpush1.msra.mxu0 0.0
    %73 = vmatprep.subr.mxu0 0.0
    %74 = vmatpush1.msra.mxu0 %v41
    %75 = vmatprep.subr.mxu0 0.0
    %76 = vmatpush1.msra.mxu0 %v40
    %77 = vmatprep.subr.mxu0 0.0
    %78 = vmatpush1.msra.mxu0 %v39
    %79 = vmatprep.subr.mxu0 0.0
    %80 = vmatpush1.msra.mxu0 %v38
    %81 = vmatprep.subr.mxu0 0.0
    %82 = vmatpush1.msra.mxu0 %v37
    %83 = vmatprep.subr.mxu0 0.0
    %84 = vmatpush1.msra.mxu0 %v36
    %85 = vmatprep.subr.mxu0 0.0
    %86 = vmatpush2.msra.mxu0 0.0
    %87 = vmatprep.subr.mxu0 0.0
    %88 = vmatpush2.msra.mxu0 0.0
    %89 = vmatprep.subr.mxu0 0.0
    %90 = vmatpush2.msra.mxu0 0.0
    %91 = vmatprep.subr.mxu0 0.0
    %92 = vmatpush2.msra.mxu0 0.0
    %93 = vmatprep.subr.mxu0 0.0
    %94 = vmatpush2.msra.mxu0 0.0
    %95 = vmatprep.subr.mxu0 0.0
    %96 = vmatpush2.msra.mxu0 0.0
    %97 = vmatprep.subr.mxu0 0.0
    %98 = vmatpush2.msra.mxu0 0.0
    %99 = vmatprep.subr.mxu0 0.0
    %100 = vmatpush2.msra.mxu0 0.0
    %101 = vmatprep.subr.mxu0 0.0
    %102 = vmatpush2.msra.mxu0 0.0
    %103 = vmatprep.subr.mxu0 0.0
    %104 = vmatpush2.msra.mxu0 0.0
    %105 = vmatprep.subr.mxu0 0.0
    %106 = vmatpush2.msra.mxu0 0.0
    %107 = vmatprep.subr.mxu0 0.0
    %108 = vmatpush2.msra.mxu0 0.0
    %109 = vmatprep.subr.mxu0 0.0
    %110 = vmatpush2.msra.mxu0 0.0
    %111 = vmatprep.subr.mxu0 0.0
    %112 = vmatpush2.msra.mxu0 0.0
    %113 = vmatprep.subr.mxu0 0.0
    %114 = vmatpush2.msra.mxu0 0.0
    %115 = vmatprep.subr.mxu0 0.0
    %116 = vmatpush2.msra.mxu0 0.0
    %117 = vmatprep.mubr.f32.mxu0 0.0
    %118 = vmatmul.mubr.f32.gmra.mxu0 %v51
    %v119 = vpop.f32.mrf.mxu0
    %v120 = vadd.f32 %v47, %v119
    %v121 = vpop.f32.mrf.mxu0
    %122 = vdwg.mxu0
    %v123 = vxor.u32 %v120, 2147483648
    %v124 = vmul.f32 %v123, 1.442695
    %v125 = vpow.pop %v124
    %v126 = vadd.f32 %v125, 1.0
    %v127 = vrcp.pop %v126
    %v128 = vmul.f32 1.0, %v127
    %v129 = vtanh.pop %v120
    %v130 = vld [vmem:[%s1] sm:$0xff]
    %v131 = vmul.f32 %v128, %v130
    %133 = vrot.lane.b32.xlu0 %v129, 96
    %v134 = vpop.permute.xlu0 %133
    %v136 = vmul.f32 %v128, %v134
    %138 = vrot.lane.b32.xlu0 %v136, 96
    %v139 = vpop.permute.xlu0 %138
    %v141 = vadd.f32 %v131, %v139
    %v142 = vtanh.pop %v141
    %144 = vrot.lane.b32.xlu0 %v142, 96
    %v145 = vpop.permute.xlu0 %144
    %v147 = vmul.f32 %v128, %v145
    %vm148 = vcmask 261120
    %149 = vst.msk [vmem:[#allocation5] sm:$0xff] %vm148, %v141
    %151 = vrot.lane.b32.xlu0 %v147, 32
    %v152 = vpop.permute.xlu0 %151
    %154 = vst.msk [vmem:[#allocation6] sm:$0xff] %vm148, %v152
    // Predicated region
    $region22: #{lstm_cell.1} parent=1 // pred_check
      _
    $region23: #{lstm_cell.1} parent=1 // pred_check_branch
      %156 = sbr.rel (0) target = $region25
    $region24: #{lstm_cell.1} parent=1 // pred_region
      %s158 = ssub.s32 128, 128
      %159 = vsyncadd [#allocation4], %s158
      %s161 = sshll.u32 [#allocation5], 4
      %s162 = int_to_ptr.vmem [resolvable:$true] %s161
      %164 = dma.vmem_to_hbm [thread:$0]  %s162, 128, %s4, [#allocation4]
    $region25: #{lstm_cell.1} parent=1 // pred_fallthru
      _
    // Predicated region
    $region26: #{lstm_cell.1} parent=1 // pred_check
      _
    $region27: #{lstm_cell.1} parent=1 // pred_check_branch
      %166 = sbr.rel (0) target = $region29
    $region28: #{lstm_cell.1} parent=1 // pred_region
      %s168 = ssub.s32 128, 128
      %169 = vsyncadd [#allocation7], %s168
      %s171 = sshll.u32 [#allocation6], 4
      %s172 = int_to_ptr.vmem [resolvable:$true] %s171
      %174 = dma.vmem_to_hbm [thread:$0]  %s172, 128, %s5, [#allocation7]
    $region29: #{lstm_cell.1} parent=1 // pred_fallthru
      _
    // Predicated region
    $region30: #{lstm_cell.1} parent=1 // pred_check
      _
    $region31: #{lstm_cell.1} parent=1 // pred_check_branch
      %176 = sbr.rel (0) target = $region33
    $region32: #{lstm_cell.1} parent=1 // pred_region
      %177 = dma.done [#allocation4], 128
    $region33: #{lstm_cell.1} parent=1 // pred_fallthru
      _
    // Predicated region
    $region34: #{lstm_cell.1} parent=1 // pred_check
      _
    $region35: #{lstm_cell.1} parent=1 // pred_check_branch
      %179 = sbr.rel (0) target = $region37
    $region36: #{lstm_cell.1} parent=1 // pred_region
      %180 = dma.done [#allocation7], 128
    $region37: #{lstm_cell.1} parent=1 // pred_fallthru
      _
    %181 = vsyncpa [#allocation3], 1
    %182 = vsyncpa [#allocation4], 1
    %183 = vsyncpa [#allocation7], 1

</llo_original>
